<compile_context>
chip_gen: v7x
topology: tpu7x:2x2x1
jax: 0.10.0
libtpu: 0.0.40
codegen_flags: <defaults>
</compile_context>

<pallas_src>
import functools

import jax
import jax.numpy as jnp
from jax.experimental import pallas as pl
from jax.experimental.pallas import tpu as pltpu


def _tv_kernel(x_ref, o_ref, *, W, valid_v, inv_nv, inv_nh):
    """One block of TN flattened channel-images, shape (TN, H*W)."""
    x = x_ref[...]                                  # (TN, L), native dtype
    TN, L = x.shape

    # Neighbour "gathers" via cyclic lane rotation (jnp.roll semantics):
    #   x_right[:, f] = x[:, (f + 1) % L]   (column neighbour)
    #   x_below[:, f] = x[:, (f + W) % L]   (row neighbour)
    x_right = pltpu.roll(x, shift=L - 1, axis=1)
    x_below = pltpu.roll(x, shift=L - W, axis=1)

    d_h = jnp.abs(x_right - x)
    d_v = jnp.abs(x_below - x)

    f = jax.lax.broadcasted_iota(jnp.int32, (TN, L), 1)
    mask_h = (f % W) != (W - 1)     # drop last column of each image row (kills wraparound)
    mask_v = f < valid_v            # drop last image row, valid_v = (H-1)*W (kills wraparound)

    # Diffs stay in the input dtype (bf16 friendly); accumulate in f32.
    s_h = jnp.sum(jnp.where(mask_h, d_h, 0).astype(jnp.float32))
    s_v = jnp.sum(jnp.where(mask_v, d_v, 0).astype(jnp.float32))

    # Normalisers (precomputed reciprocals) already include the batch mean, so
    # the wrapper only sums per-block partials.
    contrib = s_h * inv_nh + s_v * inv_nv
    o_ref[...] = jnp.broadcast_to(contrib, o_ref.shape).astype(jnp.float32)


def _pick_row_tile(n_rows, row_bytes, target_bytes=2 << 20):
    """Largest row tile that divides n_rows, satisfies the sublane constraint
    (multiple of 8 or the full extent) and keeps a block under ~target_bytes."""
    cands = [d for d in range(1, n_rows + 1)
             if n_rows % d == 0 and (d % 8 == 0 or d == n_rows)]
    fitting = [d for d in cands if d * row_bytes <= target_bytes]
    if fitting:
        return max(fitting)
    # TODO(synk): for huge per-channel images where even the smallest legal row
    # tile overflows VMEM, add H-tiling with a 1-row halo instead.
    return min(cands)


def total_variation_loss(x):
    """x: (B, C, H, W) -> scalar f32 TV loss (kornia 'mean' reduction, mean over batch)."""
    B, C, H, W = x.shape
    if H < 2 or W < 2:
        raise ValueError("TotalVariationLoss requires H >= 2 and W >= 2.")

    N, L = B * C, H * W
    x2 = x.reshape(N, L)                            # lane-dense flattened layout

    itemsize = jnp.dtype(x.dtype).itemsize
    TN = _pick_row_tile(N, L * itemsize)
    num_blocks = N // TN

    inv_nv = 1.0 / float(B * C * (H - 1) * W)       # vertical-diff normaliser (incl. batch mean)
    inv_nh = 1.0 / float(B * C * H * (W - 1))       # horizontal-diff normaliser

    kernel = functools.partial(_tv_kernel, W=W, valid_v=(H - 1) * W,
                               inv_nv=inv_nv, inv_nh=inv_nh)

    # Double-buffered input + f32 temporaries with headroom, clamped to a sane range.
    block_f32 = TN * L * 4
    vmem_limit = int(min(max(2 * TN * L * itemsize + 10 * block_f32 + (2 << 20), 32 << 20),
                         64 << 20))

    partials = pl.pallas_call(
        kernel,
        out_shape=jax.ShapeDtypeStruct((num_blocks, 8, 128), jnp.float32),
        grid=(num_blocks,),
        in_specs=[pl.BlockSpec((TN, L), lambda i: (i, 0))],
        out_specs=pl.BlockSpec((1, 8, 128), lambda i: (i, 0, 0)),
        compiler_params=pltpu.CompilerParams(
            dimension_semantics=("parallel",),      # independent per-block partials
            vmem_limit_bytes=vmem_limit,
        ),
    )(x2)

    return jnp.sum(partials[:, 0, 0])


def _reference(x):
    x = x.astype(jnp.float32)
    d1 = jnp.abs(x[:, :, 1:, :] - x[:, :, :-1, :])
    d2 = jnp.abs(x[:, :, :, 1:] - x[:, :, :, :-1])
    per_img = d1.mean(axis=(1, 2, 3)) + d2.mean(axis=(1, 2, 3))
    return jnp.mean(per_img)


if __name__ == "__main__":
    key = jax.random.PRNGKey(0)
    x = jax.random.normal(key, (2, 4, 16, 16), dtype=jnp.float32)

    loss = jax.block_until_ready(total_variation_loss(x))
    ref = jax.block_until_ready(_reference(x))

    assert jnp.allclose(loss, ref, rtol=1e-5, atol=1e-6), (loss, ref)
    print("KERNEL_OK")
</pallas_src>

<mosaic_0001>
module attributes {stable_mosaic.version = 11 : i64} {
  func.func @_tv_kernel(%arg0: i32, %arg1: memref<8x256xf32, #tpu.memory_space<vmem>>, %arg2: memref<1x8x128xf32, #tpu.memory_space<vmem>>) attributes {dimension_semantics = [#tpu.dimension_semantics<parallel>], iteration_bounds = array<i64: 1>, scalar_prefetch = 0 : i64, scratch_operands = 0 : i64, tpu.core_type = #tpu.core_type<tc>, window_params = [{transform_indices = @transform_0, window_bounds = array<i64: 8, 256>}, {transform_indices = @transform_1, window_bounds = array<i64: 1, 8, 128>}]} {
    %c0 = arith.constant 0 : index
    %c0_0 = arith.constant 0 : index
    %0 = vector.load %arg1[%c0, %c0_0] : memref<8x256xf32, #tpu.memory_space<vmem>>, vector<8x256xf32>
    %c255_i32 = arith.constant 255 : i32
    %1 = tpu.dynamic_rotate %0 by %c255_i32 dim 1 : vector<8x256xf32>, i32 -> vector<8x256xf32>
    %c240_i32 = arith.constant 240 : i32
    %2 = tpu.dynamic_rotate %0 by %c240_i32 dim 1 : vector<8x256xf32>, i32 -> vector<8x256xf32>
    %3 = arith.subf %1, %0 : vector<8x256xf32>
    %4 = math.absf %3 : vector<8x256xf32>
    %5 = arith.subf %2, %0 : vector<8x256xf32>
    %6 = math.absf %5 : vector<8x256xf32>
    %7 = tpu.iota {dimensions = array<i32: 1>} : vector<8x256xi32>
    %c16_i32 = arith.constant 16 : i32
    %c0_i32 = arith.constant 0 : i32
    %8 = arith.cmpi eq, %c16_i32, %c0_i32 : i32
    %c1_i32 = arith.constant 1 : i32
    %9 = arith.select %8, %c1_i32, %c16_i32 : i32
    %10 = vector.broadcast %9 : i32 to vector<8x256xi32>
    %11 = arith.remsi %7, %10 : vector<8x256xi32>
    %c0_i32_1 = arith.constant 0 : i32
    %12 = vector.broadcast %c0_i32_1 : i32 to vector<8x256xi32>
    %13 = arith.cmpi ne, %11, %12 : vector<8x256xi32>
    %c0_i32_2 = arith.constant 0 : i32
    %14 = vector.broadcast %c0_i32_2 : i32 to vector<8x256xi32>
    %15 = arith.cmpi slt, %11, %14 : vector<8x256xi32>
    %c0_i32_3 = arith.constant 0 : i32
    %16 = arith.cmpi slt, %9, %c0_i32_3 : i32
    %17 = vector.broadcast %16 : i1 to vector<8x256xi1>
    %18 = vector.broadcast %17 : vector<8x256xi1> to vector<8x256xi1>
    %19 = arith.xori %15, %18 : vector<8x256xi1>
    %20 = arith.andi %19, %13 : vector<8x256xi1>
    %21 = vector.broadcast %9 : i32 to vector<8x256xi32>
    %22 = arith.addi %11, %21 : vector<8x256xi32>
    %23 = arith.select %20, %22, %11 : vector<8x256xi1>, vector<8x256xi32>
    %c15_i32 = arith.constant 15 : i32
    %24 = vector.broadcast %c15_i32 : i32 to vector<8x256xi32>
    %25 = arith.cmpi ne, %23, %24 : vector<8x256xi32>
    %c240_i32_4 = arith.constant 240 : i32
    %26 = vector.broadcast %c240_i32_4 : i32 to vector<8x256xi32>
    %27 = arith.cmpi slt, %7, %26 : vector<8x256xi32>
    %c0_i32_5 = arith.constant 0 : i32
    %28 = arith.sitofp %c0_i32_5 : i32 to f32
    %29 = vector.broadcast %28 : f32 to vector<8x256xf32>
    %30 = arith.select %25, %4, %29 : vector<8x256xi1>, vector<8x256xf32>
    %31 = vector.shape_cast %30 : vector<8x256xf32> to vector<1x8x256xf32>
    %cst = arith.constant dense<0.000000e+00> : vector<1xf32>
    %32 = vector.multi_reduction <add>, %31, %cst [1, 2] : vector<1x8x256xf32> to vector<1xf32>
    %33 = vector.shape_cast %32 : vector<1xf32> to vector<1x1x1xf32>
    %34 = vector.extract %33[0, 0, 0] : f32 from vector<1x1x1xf32>
    %c0_i32_6 = arith.constant 0 : i32
    %35 = arith.sitofp %c0_i32_6 : i32 to f32
    %36 = vector.broadcast %35 : f32 to vector<8x256xf32>
    %37 = arith.select %27, %6, %36 : vector<8x256xi1>, vector<8x256xf32>
    %38 = vector.shape_cast %37 : vector<8x256xf32> to vector<1x8x256xf32>
    %cst_7 = arith.constant dense<0.000000e+00> : vector<1xf32>
    %39 = vector.multi_reduction <add>, %38, %cst_7 [1, 2] : vector<1x8x256xf32> to vector<1xf32>
    %40 = vector.shape_cast %39 : vector<1xf32> to vector<1x1x1xf32>
    %41 = vector.extract %40[0, 0, 0] : f32 from vector<1x1x1xf32>
    %cst_8 = arith.constant 5.2083336E-4 : f32
    %42 = arith.mulf %34, %cst_8 : f32
    %cst_9 = arith.constant 5.2083336E-4 : f32
    %43 = arith.mulf %41, %cst_9 : f32
    %44 = arith.addf %42, %43 : f32
    %45 = vector.broadcast %44 : f32 to vector<1x8x128xf32>
    %c0_10 = arith.constant 0 : index
    %c0_11 = arith.constant 0 : index
    %c0_12 = arith.constant 0 : index
    %46 = vector.load %arg2[%c0_10, %c0_11, %c0_12] : memref<1x8x128xf32, #tpu.memory_space<vmem>>, vector<1x8x128xf32>
    tpu.vector_store %arg2[%c0_10, %c0_11, %c0_12], %45 {strides = array<i32>} : memref<1x8x128xf32, #tpu.memory_space<vmem>>, vector<1x8x128xf32>,
    return
  }
  func.func @transform_0(%arg0: i32) -> (i32, i32) {
    %c0_i32 = arith.constant 0 : i32
    %c0_i32_0 = arith.constant 0 : i32
    return %arg0, %c0_i32 : i32, i32
  }
  func.func @transform_1(%arg0: i32) -> (i32, i32, i32) {
    %c0_i32 = arith.constant 0 : i32
    %c0_i32_0 = arith.constant 0 : i32
    %c0_i32_1 = arith.constant 0 : i32
    return %arg0, %c0_i32, %c0_i32_0 : i32, i32, i32
  }
}

</mosaic_0001>

<llo_original>
// kernel: tpu_custom_call.1
$region0: #{tpu_custom_call.1}
  #allocation0 [shape = 'u32[]', space=smem, size = 0x4, offset = 0x4, fixed_abs, tag = 'smem constant byte address 0x4 - core index']
  #allocation1 [shape = 'u32[144,128]{1,0:T(1,128)}', space=vmem, size = 0x12000, scoped, tag = 'internal scratch']
  %s0 = inlined_call_operand.hbm [shape: f32[8,256], index: 0, kind: input, shape index: {}]
  %s1 = inlined_call_operand.hbm [shape: f32[1,8,128], index: 1, kind: output, shape index: {}]
  %s2 = sld [smem:[#allocation0]]
  $region18: #{tpu_custom_call.1} parent=0
    _
  %s4 = ssub.s32 1, %s2
  %s5 = scalar_select 0, %s4, %s2
  $region1: #{tpu_custom_call.1} parent=0
    #allocation2 [shape = 'u8[8192]{0}', space=vmem, size = 0x2000, scoped, tag = 'input window, operand 0, single buffered']
    #allocation3 [shape = 's32[1]{0}', space=sflag, size = 0x4, scoped, tag = 'scoped memory for tpu_custom_call.1']
    #allocation4 [shape = 's32[1]{0}', space=sflag, size = 0x4, scoped, tag = 'scoped memory for tpu_custom_call.1']
    #allocation5 [shape = 'u8[4096]{0}', space=vmem, size = 0x1000, scoped, tag = 'output window, operand 0, single buffered']
    %6 = vsyncpa [#allocation3], 0
    %7 = vsyncpa [#allocation4], 0
    // Predicated region
    $region2: #{tpu_custom_call.1} parent=1 // pred_check
      _
    $region3: #{tpu_custom_call.1} parent=1 // pred_check_branch
      %9 = sbr.rel (0) target = $region5
    $region4: #{tpu_custom_call.1} parent=1 // pred_region
      %s11 = ssub.s32 256, 256
      %12 = vsyncadd [#allocation3], %s11
      %s14 = sshll.u32 [#allocation2], 4
      %s15 = int_to_ptr.vmem [resolvable:$true] %s14
      %17 = dma.hbm_to_vmem [thread:$0]  %s0, 256, %s15, [#allocation3]
    $region5: #{tpu_custom_call.1} parent=1 // pred_fallthru
      _
    // Predicated region
    $region6: #{tpu_custom_call.1} parent=1 // pred_check
      _
    $region7: #{tpu_custom_call.1} parent=1 // pred_check_branch
      %19 = sbr.rel (0) target = $region9
    $region8: #{tpu_custom_call.1} parent=1 // pred_region
      %20 = dma.done [#allocation3], 256
    $region9: #{tpu_custom_call.1} parent=1 // pred_fallthru
      _
    %v21 = vld [vmem:[#allocation2] sm:$0xff]
    %v22 = vld [vmem:[#allocation2 + $0x8] sm:$0xff]
    %23 = vrot.lane.b32.xlu0 %v21, 127
    %v24 = vpop.permute.xlu0 %23
    %25 = vrot.lane.b32.xlu0 %v22, 127
    %v26 = vpop.permute.xlu0 %25
    %v27 = vlaneseq
    %v28 = vand.u32 %v27, 127
    %vm29 = vcmp.lt.s32.totalorder %v28, 127
    %v30 = vsel %vm29, %v24, %v26
    %v31 = vsel %vm29, %v26, %v24
    %32 = vrot.lane.b32.xlu0 %v21, 112
    %v33 = vpop.permute.xlu0 %32
    %34 = vrot.lane.b32.xlu0 %v22, 112
    %v35 = vpop.permute.xlu0 %34
    %vm36 = vcmp.lt.s32.totalorder %v28, 112
    %v37 = vsel %vm36, %v33, %v35
    %v38 = vsel %vm36, %v35, %v33
    %v39 = vsub.f32 %v30, %v21
    %v40 = vsub.f32 %v31, %v22
    %v41 = vand.u32 2147483647, %v39
    %v42 = vand.u32 2147483647, %v40
    %v43 = vsub.f32 %v37, %v21
    %v44 = vsub.f32 %v38, %v22
    %v45 = vand.u32 2147483647, %v43
    %v46 = vand.u32 2147483647, %v44
    %v47 = vadd.s32 %v28, 128
    %vm48 = vcmp.lt.s32.totalorder %v28, 0
    %v49 = vsub.s32 0, %v28
    %v50 = vsel %vm48, %v49, %v28
    %v51 = vshrl.u32 %v50, 4
    %v52 = vand.u32 %v50, 15
    %v53 = vsub.s32 0, %v52
    %v54 = vsel %vm48, %v53, %v52
    %vm55 = vcmp.lt.s32.totalorder %v47, 0
    %v56 = vsub.s32 0, %v47
    %v57 = vsel %vm55, %v56, %v47
    %v58 = vshrl.u32 %v57, 4
    %v59 = vand.u32 %v57, 15
    %v60 = vsub.s32 0, %v59
    %v61 = vsel %vm55, %v60, %v59
    %vm62 = vcmp.ne.s32.totalorder %v54, 0
    %vm63 = vcmp.ne.s32.totalorder %v61, 0
    %vm64 = vcmp.lt.s32.totalorder %v54, 0
    %vm65 = vcmp.lt.s32.totalorder %v61, 0
    %vm66 = vmand %vm64, %vm62
    %vm67 = vmand %vm65, %vm63
    %v68 = vadd.s32 %v54, 16
    %v69 = vadd.s32 %v61, 16
    %v70 = vsel %vm66, %v68, %v54
    %v71 = vsel %vm67, %v69, %v61
    %vm72 = vcmp.ne.s32.totalorder %v70, 15
    %vm73 = vcmp.ne.s32.totalorder %v71, 15
    %vm74 = vcmp.lt.s32.totalorder %v28, 240
    %vm75 = vcmp.lt.s32.totalorder %v47, 240
    %v76 = vsel %vm72, %v41, 0.0
    %v77 = vsel %vm73, %v42, 0.0
    %v78 = vadd.f32 %v76, %v77
    %79 = vadd.xlane.f32.xlu0 %v78
    %v80 = vpop.xlane.xlu0 %79
    %v81 = vrot.slane %v80, 4
    %v82 = vadd.f32 %v80, %v81
    %v83 = vrot.slane %v82, 2
    %v84 = vadd.f32 %v82, %v83
    %v85 = vrot.slane %v84, 1
    %v86 = vadd.f32 %v84, %v85
    %s87 = vtos %v86
    %v88 = vsel %vm74, %v45, 0.0
    %v89 = vsel %vm75, %v46, 0.0
    %v90 = vadd.f32 %v88, %v89
    %91 = vadd.xlane.f32.xlu0 %v90
    %v92 = vpop.xlane.xlu0 %91
    %v93 = vrot.slane %v92, 4
    %v94 = vadd.f32 %v92, %v93
    %v95 = vrot.slane %v94, 2
    %v96 = vadd.f32 %v94, %v95
    %v97 = vrot.slane %v96, 1
    %v98 = vadd.f32 %v96, %v97
    %s99 = vtos %v98
    %s100 = smul.f32 %s87, 0.00052083336
    %s101 = smul.f32 %s99, 0.00052083336
    %s102 = sadd.f32 %s100, %s101
    %v103 = vstv %s102
    %104 = vst [vmem:[#allocation5] sm:$0xff] %v103
    // Predicated region
    $region10: #{tpu_custom_call.1} parent=1 // pred_check
      _
    $region11: #{tpu_custom_call.1} parent=1 // pred_check_branch
      %106 = sbr.rel (0) target = $region13
    $region12: #{tpu_custom_call.1} parent=1 // pred_region
      %s108 = ssub.s32 128, 128
      %109 = vsyncadd [#allocation4], %s108
      %s111 = sshll.u32 [#allocation5], 4
      %s112 = int_to_ptr.vmem [resolvable:$true] %s111
      %114 = dma.vmem_to_hbm [thread:$0]  %s112, 128, %s1, [#allocation4]
    $region13: #{tpu_custom_call.1} parent=1 // pred_fallthru
      _
    // Predicated region
    $region14: #{tpu_custom_call.1} parent=1 // pred_check
      _
    $region15: #{tpu_custom_call.1} parent=1 // pred_check_branch
      %116 = sbr.rel (0) target = $region17
    $region16: #{tpu_custom_call.1} parent=1 // pred_region
      %117 = dma.done [#allocation4], 128
    $region17: #{tpu_custom_call.1} parent=1 // pred_fallthru
      _
    %118 = vsyncpa [#allocation3], 1
    %119 = vsyncpa [#allocation4], 1

</llo_original>
